<compile_context>
chip_gen: v7x
topology: tpu7x:2x2x1
jax: 0.10.0
libtpu: 0.0.40
codegen_flags: <defaults>
</compile_context>

<pallas_src>
import functools

import jax
import jax.numpy as jnp
from jax import lax
from jax.experimental import pallas as pl
from jax.experimental.pallas import tpu as pltpu


def mlp_kernel(x_ref, w1_ref, aux_ref, b2_ref, o_ref):
    # x_ref  : (TILE_B, D)   input block, natural layout
    # w1_ref : (H, D)        fc1 weight, PyTorch layout (resident)
    # aux_ref: (H, 2)        column 0 = fc1 bias, column 1 = fc2 weight (resident)
    # b2_ref : (1,)  SMEM    fc2 bias scalar
    # o_ref  : (1, TILE_B)   lane-dense output row
    h = lax.dot_general(
        w1_ref[...], x_ref[...],
        dimension_numbers=(((1,), (1,)), ((), ())),      # contract D with D
        preferred_element_type=jnp.float32)              # MXU: (H, TILE_B)
    h = jnp.maximum(h + aux_ref[:, 0:1], 0.0)            # +b1, ReLU (VPU)
    # fc2 as VPU multiply + sublane reduce (no second MXU pass for N=1)
    y = jnp.sum(h * aux_ref[:, 1:2], axis=0, keepdims=True)   # (1, TILE_B)
    o_ref[...] = jax.nn.sigmoid(y + b2_ref[0])           # lane-dense store


def _round_up(v, m):
    return (v + m - 1) // m * m


@functools.partial(jax.jit, static_argnames=("tile_b",))
def mlp_forward(x, w1, b1, w2, b2, *, tile_b=2048):
    """x: (B, D) f32; w1: (H, D); b1: (H,); w2: (1, H); b2: (1,) -> (B,) f32."""
    B, D = x.shape
    H = w1.shape[0]
    assert tile_b % 128 == 0, "tile_b must be a multiple of 128 (lane width)"

    # Clamp the tile to the batch and keep >= 2 grid blocks when possible so
    # the parallel batch axis shards across v7x's two TensorCores.
    tile_eff = min(tile_b, _round_up(B, 128))
    n_blocks = pl.cdiv(B, tile_eff)
    if n_blocks == 1 and B > 128:
        tile_eff = _round_up(pl.cdiv(B, 2), 128)
        n_blocks = pl.cdiv(B, tile_eff)
    b_pad = n_blocks * tile_eff

    # Fuse fc1 bias + fc2 weight into a single resident operand (fewer tiny DMAs).
    aux = jnp.concatenate([b1.reshape(H, 1), w2.reshape(H, 1)], axis=1)  # (H, 2)
    b2s = b2.reshape(1).astype(jnp.float32)

    out = pl.pallas_call(
        mlp_kernel,
        out_shape=jax.ShapeDtypeStruct((1, b_pad), jnp.float32),
        grid=(n_blocks,),
        in_specs=[
            # x in natural layout, tiled over batch; the final partial block
            # (if B % tile_eff != 0) only feeds columns that are sliced off.
            pl.BlockSpec((tile_eff, D), lambda i: (i, 0)),
            pl.BlockSpec((H, D), lambda i: (0, 0)),            # fc1 weight (resident)
            pl.BlockSpec((H, 2), lambda i: (0, 0)),            # [b1 | w2] (resident)
            pl.BlockSpec(memory_space=pltpu.MemorySpace.SMEM),  # fc2 bias scalar
        ],
        out_specs=pl.BlockSpec((1, tile_eff), lambda i: (0, i)),  # lane-dense row
        compiler_params=pltpu.CompilerParams(
            dimension_semantics=("parallel",)),
    )(x, w1, aux, b2s)
    return out[0, :B]


def init_linear(key, in_features, out_features):
    """nn.Linear-style init: U(-1/sqrt(fan_in), 1/sqrt(fan_in)), PyTorch layout."""
    kw, kb = jax.random.split(key)
    bound = 1.0 / jnp.sqrt(jnp.float32(in_features))
    w = jax.random.uniform(kw, (out_features, in_features), jnp.float32,
                           minval=-bound, maxval=bound)
    b = jax.random.uniform(kb, (out_features,), jnp.float32,
                           minval=-bound, maxval=bound)
    return w, b


if __name__ == "__main__":
    input_size = 32
    batch = 200          # not a multiple of 128: exercises the partial final block

    root = jax.random.PRNGKey(0)
    k_x, k_fc1, k_fc2, k_uf, k_of = jax.random.split(root, 5)

    x = jax.random.normal(k_x, (batch, input_size), jnp.float32)

    w1, b1 = init_linear(k_fc1, input_size, 64)    # fc1: (64, D), (64,)
    w2, b2 = init_linear(k_fc2, 64, 1)             # fc2: (1, 64), (1,)
    # Defined by the module but unused in forward (kept for parameter parity):
    w_uf, b_uf = init_linear(k_uf, input_size, 1)  # under_fitting
    w_of, b_of = init_linear(k_of, 64, 1)          # over_fitting

    y = mlp_forward(x, w1, b1, w2, b2)
    jax.block_until_ready(y)

    # Pure-JAX reference (PyTorch semantics: x @ W^T + b)
    ref = jax.nn.sigmoid(
        jnp.maximum(x @ w1.T + b1, 0.0) @ w2.T + b2).reshape(-1)
    assert y.shape == (batch,)
    assert jnp.allclose(y, ref, atol=1e-5, rtol=1e-5), \
        float(jnp.max(jnp.abs(y - ref)))

    print("KERNEL_OK")
</pallas_src>

<mosaic_0001>
module attributes {stable_mosaic.version = 11 : i64} {
  func.func @mlp_kernel(%arg0: i32, %arg1: memref<128x32xf32, #tpu.memory_space<vmem>>, %arg2: memref<64x32xf32, #tpu.memory_space<vmem>>, %arg3: memref<64x2xf32, #tpu.memory_space<vmem>>, %arg4: memref<1xf32, #tpu.memory_space<smem>>, %arg5: memref<1x128xf32, #tpu.memory_space<vmem>>) attributes {dimension_semantics = [#tpu.dimension_semantics<parallel>], iteration_bounds = array<i64: 2>, scalar_prefetch = 0 : i64, scratch_operands = 0 : i64, tpu.core_type = #tpu.core_type<tc>, window_params = [{transform_indices = @transform_0, window_bounds = array<i64: 128, 32>}, {pipeline_mode = #tpu.pipeline_mode<synchronous>, transform_indices = @transform_1, window_bounds = array<i64: 64, 32>}, {pipeline_mode = #tpu.pipeline_mode<synchronous>, transform_indices = @transform_2, window_bounds = array<i64: 64, 2>}, {transform_indices = @transform_3, window_bounds = array<i64: 1>}, {transform_indices = @transform_4, window_bounds = array<i64: 1, 128>}]} {
    %c0 = arith.constant 0 : index
    %c0_0 = arith.constant 0 : index
    %0 = vector.load %arg2[%c0, %c0_0] : memref<64x32xf32, #tpu.memory_space<vmem>>, vector<64x32xf32>
    %c0_1 = arith.constant 0 : index
    %c0_2 = arith.constant 0 : index
    %1 = vector.load %arg1[%c0_1, %c0_2] : memref<128x32xf32, #tpu.memory_space<vmem>>, vector<128x32xf32>
    %cst = arith.constant dense<0.000000e+00> : vector<64x128xf32>
    %2 = tpu.matmul %0, %1, %cst {dimension_numbers = #tpu.dot_dimension_numbers<[1], [1], [0], [0], [0, 0, 1, 0], [], []>} : vector<64x32xf32>, vector<128x32xf32>, vector<64x128xf32> -> vector<64x128xf32>
    %c0_3 = arith.constant 0 : index
    %c0_4 = arith.constant 0 : index
    %3 = vector.load %arg3[%c0_3, %c0_4] : memref<64x2xf32, #tpu.memory_space<vmem>>, vector<64x1xf32>
    %4 = vector.broadcast %3 : vector<64x1xf32> to vector<64x128xf32>
    %5 = arith.addf %2, %4 : vector<64x128xf32>
    %cst_5 = arith.constant 0.000000e+00 : f32
    %6 = vector.broadcast %cst_5 : f32 to vector<64x128xf32>
    %7 = arith.maximumf %5, %6 : vector<64x128xf32>
    %c0_6 = arith.constant 0 : index
    %c1 = arith.constant 1 : index
    %8 = vector.load %arg3[%c0_6, %c1] : memref<64x2xf32, #tpu.memory_space<vmem>>, vector<64x1xf32>
    %9 = vector.broadcast %8 : vector<64x1xf32> to vector<64x128xf32>
    %10 = arith.mulf %7, %9 : vector<64x128xf32>
    %cst_7 = arith.constant dense<0.000000e+00> : vector<128xf32>
    %11 = vector.multi_reduction <add>, %10, %cst_7 [0] : vector<64x128xf32> to vector<128xf32>
    %12 = vector.shape_cast %11 : vector<128xf32> to vector<1x128xf32>
    %c0_8 = arith.constant 0 : index
    %13 = memref.load %arg4[%c0_8] : memref<1xf32, #tpu.memory_space<smem>>
    %14 = vector.broadcast %13 : f32 to vector<1x128xf32>
    %15 = arith.addf %12, %14 : vector<1x128xf32>
    %16 = arith.negf %15 : vector<1x128xf32>
    %17 = math.exp %16 : vector<1x128xf32>
    %cst_9 = arith.constant 1.000000e+00 : f32
    %18 = vector.broadcast %cst_9 : f32 to vector<1x128xf32>
    %19 = arith.addf %18, %17 : vector<1x128xf32>
    %20 = arith.divf %18, %19 : vector<1x128xf32>
    %c0_10 = arith.constant 0 : index
    %c0_11 = arith.constant 0 : index
    %21 = vector.load %arg5[%c0_10, %c0_11] : memref<1x128xf32, #tpu.memory_space<vmem>>, vector<1x128xf32>
    tpu.vector_store %arg5[%c0_10, %c0_11], %20 {strides = array<i32>} : memref<1x128xf32, #tpu.memory_space<vmem>>, vector<1x128xf32>,
    return
  }
  func.func @transform_0(%arg0: i32) -> (i32, i32) {
    %c0_i32 = arith.constant 0 : i32
    %c0_i32_0 = arith.constant 0 : i32
    return %arg0, %c0_i32 : i32, i32
  }
  func.func @transform_1(%arg0: i32) -> (i32, i32) {
    %c0_i32 = arith.constant 0 : i32
    %c0_i32_0 = arith.constant 0 : i32
    %c0_i32_1 = arith.constant 0 : i32
    return %c0_i32, %c0_i32_0 : i32, i32
  }
  func.func @transform_2(%arg0: i32) -> (i32, i32) {
    %c0_i32 = arith.constant 0 : i32
    %c0_i32_0 = arith.constant 0 : i32
    %c0_i32_1 = arith.constant 0 : i32
    return %c0_i32, %c0_i32_0 : i32, i32
  }
  func.func @transform_3(%arg0: i32) -> i32 {
    %c0_i32 = arith.constant 0 : i32
    %c0_i32_0 = arith.constant 0 : i32
    return %c0_i32 : i32
  }
  func.func @transform_4(%arg0: i32) -> (i32, i32) {
    %c0_i32 = arith.constant 0 : i32
    %c0_i32_0 = arith.constant 0 : i32
    return %c0_i32, %arg0 : i32, i32
  }
}

</mosaic_0001>

<llo_original>
// kernel: mlp_forward.1
$region0: #{mlp_forward.1}
  #allocation0 [shape = 'u32[]', space=smem, size = 0x4, offset = 0x4, fixed_abs, tag = 'smem constant byte address 0x4 - core index']
  #allocation1 [shape = 'u32[144,128]{1,0:T(1,128)}', space=vmem, size = 0x12000, scoped, tag = 'internal scratch']
  #allocation2 [shape = 'f32[1]{0:T(128)S(6)}', space=smem, size = 0x200, scoped, tag = 'scoped memory for mlp_forward.1']
  %s0 = inlined_call_operand.vmem [shape: f32[200,32], index: 0, kind: input, shape index: {}]
  %s1 = inlined_call_operand.vmem [shape: f32[64,32], index: 1, kind: input, shape index: {}]
  %s2 = inlined_call_operand.vmem [shape: f32[64,2], index: 2, kind: input, shape index: {}]
  %s3 = inlined_call_operand.<no memory space> [shape: f32[1], index: 3, kind: input, shape index: {}]
  %s4 = inlined_call_operand.hbm [shape: f32[1,256], index: 4, kind: output, shape index: {}]
  %s5 = sld [smem:[#allocation0]]
  $region49: #{mlp_forward.1} parent=0
    _
  %s7 = ssub.s32 1, %s5
  %s8 = scalar_select 0, %s7, %s5
  %9 = sst [smem:[#allocation2]] %s3
  $region1: #{mlp_forward.1} parent=0
    #allocation3 [shape = 'u8[1024]{0}', space=vmem, size = 0x400, scoped, tag = 'output window, operand 0']
    #allocation4 [shape = 's32[2]{0}', space=sflag, size = 0x8, scoped, tag = 'scoped memory for mlp_forward.1']
    %10 = vsyncpa [#allocation4], 0
    %s11 = scalar_lea.sflag [#allocation4], 1
    %12 = vsyncpa %s11, 0
    loop: start=0, step=1, limit=4
    $region2: #{mlp_forward.1} parent=1 // loop_pre_header
      _
    $region3: #{mlp_forward.1} parent=1 // loop_header
      %s14 = sphi 0, %s18
      %p15 = scmp.ge.s32.totalorder %s14, 4
      %s24 = sphi 0, %s26
      %s27 = sphi 0, %s24
      %s28 = sphi 0, %s27
      %s44 = sphi 0, %s28
      %s48 = sphi 0, %s48
      %s50 = sphi 0, %s48
      %s51 = sphi 0, %s50
      %s65 = sphi 0, %s51
      %s69 = sphi 0, %s69
      %s71 = sphi 0, %s69
      %s72 = sphi 0, %s71
      %s86 = sphi 0, %s72
      %s90 = sphi 0, %s90
      %s92 = sphi 0, %s90
      %s93 = sphi 0, %s92
      %s107 = sphi 0, %s93
      %s113 = sphi 0, %s115
      %s116 = sphi 0, %s113
      %s117 = sphi 0, %s116
      %s133 = sphi 0, %s117
    $region4: #{mlp_forward.1} parent=1 // loop_header_branch
      %17 = sbr.rel (%p15) target = $region8
    $region5: #{mlp_forward.1} parent=1 // loop_body
      %s19 = ssub.s32 %s14, 1
      %s20 = ssub.s32 %s14, 2
      %s21 = sadd.s32 %s14, 1
      %s22 = ssub.s32 %s14, %s21
      %p23 = scmp.eq.s32.totalorder %s22, 0
      %s25 = sadd.s32 %s24, 1
      %s26 = scalar_select %p23, %s24, %s25
      %p29 = pneg %p23
      %p30 = scmp.eq.s32.totalorder %s14, 1
      %p31 = por %p29, %p30
      %p32 = scmp.ne.s32.totalorder %s24, %s27
      %p33 = scmp.eq.s32.totalorder %s14, 0
      %p34 = por %p32, %p33
      %p35 = scmp.ne.s32.totalorder %s24, %s27
      %p36 = scmp.eq.s32.totalorder %s19, 1
      %p37 = por %p35, %p36
      %p38 = scmp.ne.s32.totalorder %s27, %s28
      %p39 = scmp.eq.s32.totalorder %s19, 0
      %p40 = por %p38, %p39
      %p41 = scmp.ne.s32.totalorder %s27, %s28
      %p42 = scmp.eq.s32.totalorder %s20, 1
      %p43 = por %p41, %p42
      %p45 = scmp.ne.s32.totalorder %s28, %s44
      %p46 = scmp.eq.s32.totalorder %s20, 0
      %p47 = por %p45, %p46
      %s49 = sadd.s32 %s48, 1
      %p52 = scmp.eq.s32.totalorder %s14, 1
      %p53 = scmp.ne.s32.totalorder %s48, %s50
      %p54 = scmp.eq.s32.totalorder %s14, 0
      %p55 = por %p53, %p54
      %p56 = scmp.ne.s32.totalorder %s48, %s50
      %p57 = scmp.eq.s32.totalorder %s19, 1
      %p58 = por %p56, %p57
      %p59 = scmp.ne.s32.totalorder %s50, %s51
      %p60 = scmp.eq.s32.totalorder %s19, 0
      %p61 = por %p59, %p60
      %p62 = scmp.ne.s32.totalorder %s50, %s51
      %p63 = scmp.eq.s32.totalorder %s20, 1
      %p64 = por %p62, %p63
      %p66 = scmp.ne.s32.totalorder %s51, %s65
      %p67 = scmp.eq.s32.totalorder %s20, 0
      %p68 = por %p66, %p67
      %s70 = sadd.s32 %s69, 1
      %p73 = scmp.eq.s32.totalorder %s14, 1
      %p74 = scmp.ne.s32.totalorder %s69, %s71
      %p75 = scmp.eq.s32.totalorder %s14, 0
      %p76 = por %p74, %p75
      %p77 = scmp.ne.s32.totalorder %s69, %s71
      %p78 = scmp.eq.s32.totalorder %s19, 1
      %p79 = por %p77, %p78
      %p80 = scmp.ne.s32.totalorder %s71, %s72
      %p81 = scmp.eq.s32.totalorder %s19, 0
      %p82 = por %p80, %p81
      %p83 = scmp.ne.s32.totalorder %s71, %s72
      %p84 = scmp.eq.s32.totalorder %s20, 1
      %p85 = por %p83, %p84
      %p87 = scmp.ne.s32.totalorder %s72, %s86
      %p88 = scmp.eq.s32.totalorder %s20, 0
      %p89 = por %p87, %p88
      %s91 = sadd.s32 %s90, 1
      %p94 = scmp.eq.s32.totalorder %s14, 1
      %p95 = scmp.ne.s32.totalorder %s90, %s92
      %p96 = scmp.eq.s32.totalorder %s14, 0
      %p97 = por %p95, %p96
      %p98 = scmp.ne.s32.totalorder %s90, %s92
      %p99 = scmp.eq.s32.totalorder %s19, 1
      %p100 = por %p98, %p99
      %p101 = scmp.ne.s32.totalorder %s92, %s93
      %p102 = scmp.eq.s32.totalorder %s19, 0
      %p103 = por %p101, %p102
      %p104 = scmp.ne.s32.totalorder %s92, %s93
      %p105 = scmp.eq.s32.totalorder %s20, 1
      %p106 = por %p104, %p105
      %p108 = scmp.ne.s32.totalorder %s93, %s107
      %p109 = scmp.eq.s32.totalorder %s20, 0
      %p110 = por %p108, %p109
      %s111 = ssub.s32 %s14, %s21
      %p112 = scmp.eq.s32.totalorder %s111, 0
      %s114 = sadd.s32 %s113, 1
      %s115 = scalar_select %p112, %s113, %s114
      %p118 = pneg %p112
      %p119 = scmp.eq.s32.totalorder %s14, 1
      %p120 = por %p118, %p119
      %p121 = scmp.ne.s32.totalorder %s113, %s116
      %p122 = scmp.eq.s32.totalorder %s14, 0
      %p123 = por %p121, %p122
      %p124 = scmp.ne.s32.totalorder %s113, %s116
      %p125 = scmp.eq.s32.totalorder %s19, 1
      %p126 = por %p124, %p125
      %p127 = scmp.ne.s32.totalorder %s116, %s117
      %p128 = scmp.eq.s32.totalorder %s19, 0
      %p129 = por %p127, %p128
      %p130 = scmp.ne.s32.totalorder %s116, %s117
      %p131 = scmp.eq.s32.totalorder %s20, 1
      %p132 = por %p130, %p131
      %p134 = scmp.ne.s32.totalorder %s117, %s133
      %p135 = scmp.eq.s32.totalorder %s20, 0
      %p136 = por %p134, %p135
      %p137 = scmp.le.s32.totalorder 1, %s14
      %p138 = scmp.lt.s32.totalorder %s14, 3
      %p139 = pnand %p137, %p138
      %p140 = pneg %p139
      // Predicated region
      $region9: #{mlp_forward.1} parent=5 // pred_check
        _
      $region10: #{mlp_forward.1} parent=5 // pred_check_branch
        %142 = sbr.rel (%p139) target = $region12
      $region11: #{mlp_forward.1} parent=5 // pred_region
        %s143 = ssub.s32 %s14, 1
        // Predicated region
        $region13: #{mlp_forward.1} parent=11 // pred_check
          %p144 = pneg %p61
        $region14: #{mlp_forward.1} parent=11 // pred_check_branch
          %146 = sbr.rel (%p144) target = $region16
        $region15: #{mlp_forward.1} parent=11 // pred_region
          _
        $region16: #{mlp_forward.1} parent=11 // pred_fallthru
          _
        // Predicated region
        $region17: #{mlp_forward.1} parent=11 // pred_check
          %p147 = pneg %p82
        $region18: #{mlp_forward.1} parent=11 // pred_check_branch
          %149 = sbr.rel (%p147) target = $region20
        $region19: #{mlp_forward.1} parent=11 // pred_region
          _
        $region20: #{mlp_forward.1} parent=11 // pred_fallthru
          _
        // Predicated region
        $region21: #{mlp_forward.1} parent=11 // pred_check
          %p150 = pneg %p103
        $region22: #{mlp_forward.1} parent=11 // pred_check_branch
          %152 = sbr.rel (%p150) target = $region24
        $region23: #{mlp_forward.1} parent=11 // pred_region
          _
        $region24: #{mlp_forward.1} parent=11 // pred_fallthru
          _
      $region12: #{mlp_forward.1} parent=5 // pred_fallthru
        _
      %p153 = scmp.lt.s32.totalorder %s14, 2
      // Predicated region
      $region25: #{mlp_forward.1} parent=5 // pred_check
        %p154 = pneg %p153
      $region26: #{mlp_forward.1} parent=5 // pred_check_branch
        %156 = sbr.rel (%p154) target = $region28
      $region27: #{mlp_forward.1} parent=5 // pred_region
        // Predicated region
        $region29: #{mlp_forward.1} parent=27 // pred_check
          %p157 = pneg %p34
        $region30: #{mlp_forward.1} parent=27 // pred_check_branch
          %159 = sbr.rel (%p157) target = $region32
        $region31: #{mlp_forward.1} parent=27 // pred_region
          %s160 = smul.u32 16, %s14
          %s161 = ssub.s32 25, %s160
          %p162 = scmp.lt.s32.totalorder %s161, 16
          %s163 = scalar_select %p162, %s161, 16
          %s164 = smul.u32 128, %s163
          %p165 = scmp.lt.s32.totalorder %s160, 24
          %s166 = scalar_select %p165, %s160, 24
          %s167 = smul.addr %s166, 8
          %s168 = scalar_lea.vmem %s0, %s167
          %s169 = smul.u32 16, %s14
          %s170 = ssub.s32 25, %s169
          %p171 = scmp.lt.s32.totalorder %s170, 16
          %s172 = scalar_select %p171, %s170, 16
          %s173 = smul.u32 128, %s172
        $region32: #{mlp_forward.1} parent=27 // pred_fallthru
          _
      $region28: #{mlp_forward.1} parent=5 // pred_fallthru
        _
      %p174 = scmp.le.s32.totalorder 1, %s14
      %p175 = scmp.lt.s32.totalorder %s14, 3
      %p176 = pnand %p174, %p175
      %p177 = pneg %p176
      // Predicated region
      $region33: #{mlp_forward.1} parent=5 // pred_check
        _
      $region34: #{mlp_forward.1} parent=5 // pred_check_branch
        %179 = sbr.rel (%p176) target = $region36
      $region35: #{mlp_forward.1} parent=5 // pred_region
        %s180 = ssub.s32 %s14, 1
        %s181 = smul.u32 16, %s19
        %s182 = ssub.s32 25, %s181
        %p183 = scmp.lt.s32.totalorder %s182, 16
        %s184 = scalar_select %p183, %s182, 16
        %s185 = smul.u32 128, %s184
        %p186 = scmp.lt.s32.totalorder %s181, 24
        %s187 = scalar_select %p186, %s181, 24
        %s188 = smul.addr %s187, 8
        %s189 = scalar_lea.vmem %s0, %s188
        %p190 = pneg %p40
        %p191 = pneg %p37
        %p192 = pneg %p61
        %p193 = pneg %p58
        %p194 = pneg %p82
        %p195 = pneg %p79
        %p196 = pneg %p103
        %p197 = pneg %p100
        %p198 = pneg %p129
        %p199 = pneg %p126
        %s200 = sand.u32 %s116, 1
        %s201 = scalar_lea.sflag [#allocation4], %s200
        %s202 = sand.u32 %s116, 1
        %s203 = scalar_lea.vmem [#allocation3], %s202
        %s204 = smul.u32 16, %s19
        %s205 = ssub.s32 25, %s204
        %p206 = scmp.lt.s32.totalorder %s205, 16
        %s207 = scalar_select %p206, %s205, 16
        %s208 = smul.u32 128, %s207
        %p209 = scmp.lt.s32.totalorder %s204, 24
        %s210 = scalar_select %p209, %s204, 24
        %s211 = smul.addr %s210, 8
        %s212 = scalar_lea.vmem %s0, %s211
        %s213 = smul.u32 16, %s19
        %s214 = ssub.s32 25, %s213
        %p215 = scmp.lt.s32.totalorder %s214, 16
        %s216 = scalar_select %p215, %s214, 16
        %s217 = smul.u32 128, %s216
        %v218 = vld [vmem:[%s1] sm:$0xff]
        %v219 = vld [vmem:[%s1 + $0x8] sm:$0xff]
        %v220 = vld [vmem:[%s1 + $0x10] sm:$0xff]
        %v221 = vld [vmem:[%s1 + $0x18] sm:$0xff]
        %v222 = vld [vmem:[%s1 + $0x20] sm:$0xff]
        %v223 = vld [vmem:[%s1 + $0x28] sm:$0xff]
        %v224 = vld [vmem:[%s1 + $0x30] sm:$0xff]
        %v225 = vld [vmem:[%s1 + $0x38] sm:$0xff]
        %v226 = vld [vmem:[%s212] sm:$0xff]
        %v227 = vld [vmem:[%s212 + $0x8] sm:$0xff]
        %v228 = vld [vmem:[%s212 + $0x10] sm:$0xff]
        %v229 = vld [vmem:[%s212 + $0x18] sm:$0xff]
        %v230 = vld [vmem:[%s212 + $0x20] sm:$0xff]
        %v231 = vld [vmem:[%s212 + $0x28] sm:$0xff]
        %v232 = vld [vmem:[%s212 + $0x30] sm:$0xff]
        %v233 = vld [vmem:[%s212 + $0x38] sm:$0xff]
        %v234 = vld [vmem:[%s212 + $0x40] sm:$0xff]
        %v235 = vld [vmem:[%s212 + $0x48] sm:$0xff]
        %v236 = vld [vmem:[%s212 + $0x50] sm:$0xff]
        %v237 = vld [vmem:[%s212 + $0x58] sm:$0xff]
        %v238 = vld [vmem:[%s212 + $0x60] sm:$0xff]
        %v239 = vld [vmem:[%s212 + $0x68] sm:$0xff]
        %v240 = vld [vmem:[%s212 + $0x70] sm:$0xff]
        %v241 = vld [vmem:[%s212 + $0x78] sm:$0xff]
        %v242 = vld [vmem:[%s2] sm:$0xff]
        %v243 = vld [vmem:[%s2 + $0x8] sm:$0xff]
        %v244 = vld [vmem:[%s2 + $0x10] sm:$0xff]
        %v245 = vld [vmem:[%s2 + $0x18] sm:$0xff]
        %v246 = vld [vmem:[%s2 + $0x20] sm:$0xff]
        %v247 = vld [vmem:[%s2 + $0x28] sm:$0xff]
        %v248 = vld [vmem:[%s2 + $0x30] sm:$0xff]
        %v249 = vld [vmem:[%s2 + $0x38] sm:$0xff]
        %251 = vset.pattern.permute.xlu0 0
        %252 = vperm.xlu0 %251, %v242
        %v253 = vpop.permute.xlu0 %252
        %256 = vset.pattern.permute.xlu0 0
        %257 = vperm.xlu0 %256, %v243
        %v258 = vpop.permute.xlu0 %257
        %261 = vset.pattern.permute.xlu0 0
        %262 = vperm.xlu0 %261, %v244
        %v263 = vpop.permute.xlu0 %262
        %266 = vset.pattern.permute.xlu0 0
        %267 = vperm.xlu0 %266, %v245
        %v268 = vpop.permute.xlu0 %267
        %271 = vset.pattern.permute.xlu0 0
        %272 = vperm.xlu0 %271, %v246
        %v273 = vpop.permute.xlu0 %272
        %276 = vset.pattern.permute.xlu0 0
        %277 = vperm.xlu0 %276, %v247
        %v278 = vpop.permute.xlu0 %277
        %281 = vset.pattern.permute.xlu0 0
        %282 = vperm.xlu0 %281, %v248
        %v283 = vpop.permute.xlu0 %282
        %286 = vset.pattern.permute.xlu0 0
        %287 = vperm.xlu0 %286, %v249
        %v288 = vpop.permute.xlu0 %287
        %vm290 = vcmask 261120
        %v292 = vsel %vm290, %v218, 0
        %v295 = vsel %vm290, %v219, 0
        %v298 = vsel %vm290, %v220, 0
        %v301 = vsel %vm290, %v221, 0
        %v304 = vsel %vm290, %v222, 0
        %v307 = vsel %vm290, %v223, 0
        %v310 = vsel %vm290, %v224, 0
        %v313 = vsel %vm290, %v225, 0
        %v316 = vsel %vm290, %v226, 0
        %v319 = vsel %vm290, %v227, 0
        %v322 = vsel %vm290, %v228, 0
        %v325 = vsel %vm290, %v229, 0
        %v328 = vsel %vm290, %v230, 0
        %v331 = vsel %vm290, %v231, 0
        %v334 = vsel %vm290, %v232, 0
        %v337 = vsel %vm290, %v233, 0
        %v340 = vsel %vm290, %v234, 0
        %v343 = vsel %vm290, %v235, 0
        %v346 = vsel %vm290, %v236, 0
        %v349 = vsel %vm290, %v237, 0
        %v352 = vsel %vm290, %v238, 0
        %v355 = vsel %vm290, %v239, 0
        %v358 = vsel %vm290, %v240, 0
        %v361 = vsel %vm290, %v241, 0
        %363 = vmatprep.subr.mxu0 0.0
        %364 = vmatpush1.xpose.msra.mxu0 %v316
        %365 = vmatprep.subr.mxu0 0.0
        %366 = vmatpush1.xpose.msra.mxu0 %v319
        %367 = vmatprep.subr.mxu0 0.0
        %368 = vmatpush1.xpose.msra.mxu0 %v322
        %369 = vmatprep.subr.mxu0 0.0
        %370 = vmatpush1.xpose.msra.mxu0 %v325
        %371 = vmatprep.subr.mxu0 0.0
        %372 = vmatpush1.xpose.msra.mxu0 %v328
        %373 = vmatprep.subr.mxu0 0.0
        %374 = vmatpush1.xpose.msra.mxu0 %v331
        %375 = vmatprep.subr.mxu0 0.0
        %376 = vmatpush1.xpose.msra.mxu0 %v334
        %377 = vmatprep.subr.mxu0 0.0
        %378 = vmatpush1.xpose.msra.mxu0 %v337
        %379 = vmatprep.subr.mxu0 0.0
        %380 = vmatpush1.xpose.msra.mxu0 %v340
        %381 = vmatprep.subr.mxu0 0.0
        %382 = vmatpush1.xpose.msra.mxu0 %v343
        %383 = vmatprep.subr.mxu0 0.0
        %384 = vmatpush1.xpose.msra.mxu0 %v346
        %385 = vmatprep.subr.mxu0 0.0
        %386 = vmatpush1.xpose.msra.mxu0 %v349
        %387 = vmatprep.subr.mxu0 0.0
        %388 = vmatpush1.xpose.msra.mxu0 %v352
        %389 = vmatprep.subr.mxu0 0.0
        %390 = vmatpush1.xpose.msra.mxu0 %v355
        %391 = vmatprep.subr.mxu0 0.0
        %392 = vmatpush1.xpose.msra.mxu0 %v358
        %393 = vmatprep.subr.mxu0 0.0
        %394 = vmatpush1.xpose.msra.mxu0 %v361
        %395 = vmatprep.subr.mxu0 0.0
        %396 = vmatpush1.xpose.msra.mxu0 0.0
        %397 = vmatprep.subr.mxu0 0.0
        %398 = vmatpush1.xpose.msra.mxu0 0.0
        %399 = vmatprep.subr.mxu0 0.0
        %400 = vmatpush1.xpose.msra.mxu0 0.0
        %401 = vmatprep.subr.mxu0 0.0
        %402 = vmatpush1.xpose.msra.mxu0 0.0
        %403 = vmatprep.subr.mxu0 0.0
        %404 = vmatpush1.xpose.msra.mxu0 0.0
        %405 = vmatprep.subr.mxu0 0.0
        %406 = vmatpush1.xpose.msra.mxu0 0.0
        %407 = vmatprep.subr.mxu0 0.0
        %408 = vmatpush1.xpose.msra.mxu0 0.0
        %409 = vmatprep.subr.mxu0 0.0
        %410 = vmatpush1.xpose.msra.mxu0 0.0
        %411 = vmatprep.subr.mxu0 0.0
        %412 = vmatpush1.xpose.msra.mxu0 0.0
        %413 = vmatprep.subr.mxu0 0.0
        %414 = vmatpush1.xpose.msra.mxu0 0.0
        %415 = vmatprep.subr.mxu0 0.0
        %416 = vmatpush1.xpose.msra.mxu0 0.0
        %417 = vmatprep.subr.mxu0 0.0
        %418 = vmatpush1.xpose.msra.mxu0 0.0
        %419 = vmatprep.subr.mxu0 0.0
        %420 = vmatpush1.xpose.msra.mxu0 0.0
        %421 = vmatprep.subr.mxu0 0.0
        %422 = vmatpush1.xpose.msra.mxu0 0.0
        %423 = vmatprep.subr.mxu0 0.0
        %424 = vmatpush1.xpose.msra.mxu0 0.0
        %425 = vmatprep.subr.mxu0 0.0
        %426 = vmatpush1.xpose.msra.mxu0 0.0
        %427 = vmatprep.mubr.f32.mxu0 0.0
        %428 = vmatmul.mubr.f32.gmra.mrb[0].mxu0 %v292
        %v429 = vpop.f32.mrb[0].mxu0
        %v430 = vadd.f32 %v253, %v429
        %v431 = vpop.f32.mrb[0].mxu0
        %432 = vmatprep.mubr.f32.mxu0 0.0
        %433 = vmatmul.mubr.f32.gmra.mrb[0].mxu0 %v295
        %v434 = vpop.f32.mrb[0].mxu0
        %v435 = vadd.f32 %v258, %v434
        %v436 = vpop.f32.mrb[0].mxu0
        %437 = vmatprep.mubr.f32.mxu0 0.0
        %438 = vmatmul.mubr.f32.gmra.mrb[0].mxu0 %v298
        %v439 = vpop.f32.mrb[0].mxu0
        %v440 = vadd.f32 %v263, %v439
        %v441 = vpop.f32.mrb[0].mxu0
        %442 = vmatprep.mubr.f32.mxu0 0.0
        %443 = vmatmul.mubr.f32.gmra.mrb[0].mxu0 %v301
        %v444 = vpop.f32.mrb[0].mxu0
        %v445 = vadd.f32 %v268, %v444
        %v446 = vpop.f32.mrb[0].mxu0
        %447 = vmatprep.mubr.f32.mxu0 0.0
        %448 = vmatmul.mubr.f32.gmra.mrb[0].mxu0 %v304
        %v449 = vpop.f32.mrb[0].mxu0
        %v450 = vadd.f32 %v273, %v449
        %v451 = vpop.f32.mrb[0].mxu0
        %452 = vmatprep.mubr.f32.mxu0 0.0
        %453 = vmatmul.mubr.f32.gmra.mrb[0].mxu0 %v307
        %v454 = vpop.f32.mrb[0].mxu0
        %v455 = vadd.f32 %v278, %v454
        %v456 = vpop.f32.mrb[0].mxu0
        %457 = vmatprep.mubr.f32.mxu0 0.0
        %458 = vmatmul.mubr.f32.gmra.mrb[0].mxu0 %v310
        %v459 = vpop.f32.mrb[0].mxu0
        %v460 = vadd.f32 %v283, %v459
        %v461 = vpop.f32.mrb[0].mxu0
        %462 = vmatprep.mubr.f32.mxu0 0.0
        %463 = vmatmul.mubr.f32.gmra.mrb[0].mxu0 %v313
        %v464 = vpop.f32.mrb[0].mxu0
        %v465 = vadd.f32 %v288, %v464
        %v466 = vpop.f32.mrb[0].mxu0
        %467 = vdwg.mxu0
        %v468 = vmax.f32 %v430, 0.0
        %v469 = vmax.f32 %v435, 0.0
        %v470 = vmax.f32 %v440, 0.0
        %v471 = vmax.f32 %v445, 0.0
        %v472 = vmax.f32 %v450, 0.0
        %v473 = vmax.f32 %v455, 0.0
        %v474 = vmax.f32 %v460, 0.0
        %v475 = vmax.f32 %v465, 0.0
        %476 = vset.pattern.permute.xlu0 1
        %477 = vperm.xlu0 %476, %v242
        %v478 = vpop.permute.xlu0 %477
        %480 = vset.pattern.permute.xlu0 1
        %481 = vperm.xlu0 %480, %v243
        %v482 = vpop.permute.xlu0 %481
        %484 = vset.pattern.permute.xlu0 1
        %485 = vperm.xlu0 %484, %v244
        %v486 = vpop.permute.xlu0 %485
        %488 = vset.pattern.permute.xlu0 1
        %489 = vperm.xlu0 %488, %v245
        %v490 = vpop.permute.xlu0 %489
        %492 = vset.pattern.permute.xlu0 1
        %493 = vperm.xlu0 %492, %v246
        %v494 = vpop.permute.xlu0 %493
        %496 = vset.pattern.permute.xlu0 1
        %497 = vperm.xlu0 %496, %v247
        %v498 = vpop.permute.xlu0 %497
        %500 = vset.pattern.permute.xlu0 1
        %501 = vperm.xlu0 %500, %v248
        %v502 = vpop.permute.xlu0 %501
        %504 = vset.pattern.permute.xlu0 1
        %505 = vperm.xlu0 %504, %v249
        %v506 = vpop.permute.xlu0 %505
        %v508 = vmul.f32 %v468, %v478
        %v509 = vmul.f32 %v469, %v482
        %v510 = vmul.f32 %v470, %v486
        %v511 = vmul.f32 %v471, %v490
        %v512 = vmul.f32 %v472, %v494
        %v513 = vmul.f32 %v473, %v498
        %v514 = vmul.f32 %v474, %v502
        %v515 = vmul.f32 %v475, %v506
        %v516 = vadd.f32 %v508, %v509
        %v517 = vadd.f32 %v516, %v510
        %v518 = vadd.f32 %v517, %v511
        %v519 = vadd.f32 %v518, %v512
        %v520 = vadd.f32 %v519, %v513
        %v521 = vadd.f32 %v520, %v514
        %v522 = vadd.f32 %v521, %v515
        %v523 = vrot.slane %v522, 4
        %v524 = vadd.f32 %v522, %v523
        %v525 = vrot.slane %v524, 2
        %v526 = vadd.f32 %v524, %v525
        %v527 = vrot.slane %v526, 1
        %v528 = vadd.f32 %v526, %v527
        %s529 = sld [smem:[#allocation2]]
        %v530 = vstv %s529
        %v531 = vadd.f32 %v528, %v530
        %v532 = vxor.u32 %v531, 2147483648
        %v533 = vmul.f32 %v532, 1.442695
        %v534 = vpow.pop %v533
        %v535 = vadd.f32 %v534, 1.0
        %v536 = vrcp.pop %v535
        %v537 = vmul.f32 1.0, %v536
        %538 = vst [vmem:[%s203] sm:$0x1] %v537
        %s539 = sand.u32 %s116, 1
        %s540 = scalar_lea.sflag [#allocation4], %s539
        %s541 = sand.u32 %s116, 1
        %s542 = scalar_lea.vmem [#allocation3], %s541
        // Predicated region
        $region37: #{mlp_forward.1} parent=35 // pred_check
          %p543 = pneg %p126
        $region38: #{mlp_forward.1} parent=35 // pred_check_branch
          %545 = sbr.rel (%p543) target = $region40
        $region39: #{mlp_forward.1} parent=35 // pred_region
          %s547 = ssub.s32 16, 16
          %548 = vsyncadd %s540, %s547
          %s549 = smul.addr %s19, 16
          %s550 = scalar_lea.hbm %s4, %s549
          %s552 = sshll.u32 %s542, 4
          %s553 = int_to_ptr.vmem [resolvable:$true] %s552
          %555 = dma.vmem_to_hbm [thread:$0]  %s553, 16, %s550, %s540
        $region40: #{mlp_forward.1} parent=35 // pred_fallthru
          _
      $region36: #{mlp_forward.1} parent=5 // pred_fallthru
        _
      %p556 = scmp.le.s32.totalorder 2, %s14
      // Predicated region
      $region41: #{mlp_forward.1} parent=5 // pred_check
        %p557 = pneg %p556
      $region42: #{mlp_forward.1} parent=5 // pred_check_branch
        %559 = sbr.rel (%p557) target = $region44
      $region43: #{mlp_forward.1} parent=5 // pred_region
        %s560 = ssub.s32 %s14, 2
        // Predicated region
        $region45: #{mlp_forward.1} parent=43 // pred_check
          %p561 = pneg %p132
        $region46: #{mlp_forward.1} parent=43 // pred_check_branch
          %563 = sbr.rel (%p561) target = $region48
        $region47: #{mlp_forward.1} parent=43 // pred_region
          %s564 = sand.u32 %s117, 1
          %s565 = scalar_lea.sflag [#allocation4], %s564
          %s566 = sand.u32 %s117, 1
          %s567 = scalar_lea.vmem [#allocation3], %s566
          %568 = dma.done %s565, 16
        $region48: #{mlp_forward.1} parent=43 // pred_fallthru
          _
      $region44: #{mlp_forward.1} parent=5 // pred_fallthru
        _
    $region6: #{mlp_forward.1} parent=1 // loop_footer
      %s18 = sadd.s32 1, %s14
    $region7: #{mlp_forward.1} parent=1 // loop_footer_branch
      %13 = sbr.rel target = $region3
    $region8: #{mlp_forward.1} parent=1 // loop_exit
      _
    %569 = vsyncpa [#allocation4], 1
    %s570 = scalar_lea.sflag [#allocation4], 1
    %571 = vsyncpa %s570, 1

</llo_original>
